<compile_context>
chip_gen: v7x
topology: tpu7x:2x2x1
jax: 0.10.0
libtpu: 0.0.40
codegen_flags: <defaults>
</compile_context>

<pallas_src>
import jax
import jax.numpy as jnp
from jax.experimental import pallas as pl
from jax.experimental.pallas import tpu as pltpu

CIN, COUT, KH, KW = 3, 128, 3, 3
H, W = 6, 7
K = CIN * KH * KW          # 27
KP = 32                    # K padded to a multiple of 8 (clean bf16 sublane packing)
BN_EPS = 1e-5
_TM_MAX = 8192             # max lane-tile; caps per-step VMEM at a few MiB


def conv_bn_relu_kernel(w_ref, p_ref, scale_ref, bias_ref, o_ref):
    # (Cout, KP) @ (KP, TM) on the MXU, f32 accumulation.
    acc = jnp.dot(w_ref[...], p_ref[...], preferred_element_type=jnp.float32)
    # f32 epilogue: per-channel BN scale, folded bias, ReLU; cast is the last op
    # so the store is a packed bf16 store (halves store-slot pressure / HBM out).
    y = acc * scale_ref[...] + bias_ref[...]
    o_ref[...] = jnp.maximum(y, 0.0).astype(o_ref.dtype)


def prepare_params(conv_w, conv_b, bn_gamma, bn_beta, bn_mean, bn_var, eps=BN_EPS):
    """One-time (weight-load-time) folding of conv bias + inference BatchNorm.

    Returns:
      w_pad: (Cout, KP) bf16 conv weights, K zero-padded 27->32 (UNscaled: the
             BN scale is applied in the f32 epilogue to preserve precision).
      scale: (Cout, 1) f32 per-channel BN scale (gamma / sqrt(var + eps)).
      bias:  (Cout, 1) f32 per-channel bias ((conv_b - mean) * scale + beta).
    """
    inv_std = 1.0 / jnp.sqrt(bn_var.astype(jnp.float32) + eps)
    scale = bn_gamma.astype(jnp.float32) * inv_std                         # (Cout,)
    w_mat = conv_w.reshape(COUT, K).astype(jnp.float32)                    # k = cin*9 + kh*3 + kw
    w_pad = jnp.pad(w_mat, ((0, 0), (0, KP - K))).astype(jnp.bfloat16)     # (Cout, 32)
    bias = ((conv_b.astype(jnp.float32) - bn_mean.astype(jnp.float32)) * scale
            + bn_beta.astype(jnp.float32))
    return w_pad, scale.reshape(COUT, 1), bias.reshape(COUT, 1)


def _is_multi_tensorcore():
    """True on chips with >1 TensorCore sharing the 'parallel' grid axes (v7x)."""
    try:
        kind = jax.devices()[0].device_kind.lower()
    except Exception:
        return False
    return "7" in kind


def _pick_grid_m(m):
    """Lane-axis tile (multiple of 128) and padded M.

    Jointly minimizes grid-step count (~0.35 us/step overhead) and padded-column
    waste (padded columns are computed + written to HBM, then discarded).  On
    multi-TC chips, forces an even number of steps >= 2 when M is large enough
    so the 'parallel' axis can shard across both TensorCores.
    """
    n_steps = pl.cdiv(m, _TM_MAX)
    if _is_multi_tensorcore() and m > 2 * 128:
        n_steps = pl.cdiv(n_steps, 2) * 2          # even, >= 2
    n_steps = max(n_steps, 1)
    tm = pl.cdiv(pl.cdiv(m, n_steps), 128) * 128
    tm = max(tm, 128)
    m_pad = pl.cdiv(m, tm) * tm
    return tm, m_pad


def conv_block_forward(s, w_pad, scale, bias, *, nchw_output=True,
                       out_dtype=jnp.bfloat16):
    """Forward pass. `w_pad`/`scale`/`bias` come from prepare_params (called once).

    nchw_output=True  -> (N, Cout, H, W) to match the PyTorch module.
    nchw_output=False -> lane-dense (Cout, N, H, W), no transpose (preferred when
                         the consumer re-im2cols anyway).
    """
    x = s.reshape(-1, CIN, H, W).astype(jnp.bfloat16)        # NCHW, bf16 operands
    n = x.shape[0]
    m = n * H * W

    # --- im2col, directly in transposed (K, M) layout (XLA-side glue) -------
    xp = jnp.pad(x, ((0, 0), (0, 0), (1, 1), (1, 1)))         # (N, Cin, H+2, W+2)
    xp = jnp.moveaxis(xp, 0, 1)                               # (Cin, N, H+2, W+2), leading dims only
    cols = [xp[:, :, kh:kh + H, kw:kw + W]                    # each (Cin, N, H, W)
            for kh in range(KH) for kw in range(KW)]
    pt = jnp.stack(cols, axis=1).reshape(K, m)                # (27, M), k = cin*9 + kh*3 + kw

    tm, m_pad = _pick_grid_m(m)
    pt = jnp.pad(pt, ((0, KP - K), (0, m_pad - m)))           # zero-pad K->32 and M->M_pad

    out = pl.pallas_call(
        conv_bn_relu_kernel,
        out_shape=jax.ShapeDtypeStruct((COUT, m_pad), out_dtype),
        grid_spec=pltpu.PrefetchScalarGridSpec(
            num_scalar_prefetch=0,
            grid=(m_pad // tm,),
            in_specs=[
                pl.BlockSpec((COUT, KP), lambda i: (0, 0)),    # weights, VMEM-resident
                pl.BlockSpec((KP, tm), lambda i: (0, i)),      # patches^T tile (lane-dense in M)
                pl.BlockSpec((COUT, 1), lambda i: (0, 0)),     # BN scale, VMEM-resident
                pl.BlockSpec((COUT, 1), lambda i: (0, 0)),     # folded bias, VMEM-resident
            ],
            out_specs=pl.BlockSpec((COUT, tm), lambda i: (0, i)),
        ),
        compiler_params=pltpu.CompilerParams(
            dimension_semantics=("parallel",),                 # independent M tiles -> megacore on v7x
        ),
    )(w_pad, pt, scale, bias)

    # Padded M columns hold relu(bias); they are sliced off here.  Any consumer
    # of the un-sliced lane-dense output must mask them.
    out = out[:, :m].reshape(COUT, n, H, W)                    # CNHW (minor H,W layout untouched)
    if nchw_output:
        # Leading-dims permute only, now in bf16 (half the transpose traffic),
        # kept to match the PyTorch module's NCHW output convention.
        out = jnp.transpose(out, (1, 0, 2, 3))                 # (N, Cout, H, W)
    return out


def _reference(s, conv_w, conv_b, bn_gamma, bn_beta, bn_mean, bn_var):
    x = s.reshape(-1, CIN, H, W).astype(jnp.float32)
    y = jax.lax.conv_general_dilated(
        x, conv_w.astype(jnp.float32),
        window_strides=(1, 1), padding=((1, 1), (1, 1)),
        dimension_numbers=("NCHW", "OIHW", "NCHW"))
    y = y + conv_b[None, :, None, None]
    inv_std = 1.0 / jnp.sqrt(bn_var + BN_EPS)
    y = (y - bn_mean[None, :, None, None]) * (bn_gamma * inv_std)[None, :, None, None] \
        + bn_beta[None, :, None, None]
    return jnp.maximum(y, 0.0)


if __name__ == "__main__":
    key = jax.random.PRNGKey(0)
    k_s, k_w, k_b, k_g, k_be, k_m, k_v = jax.random.split(key, 7)

    N = 2
    s = jax.random.normal(k_s, (N, 3, 6, 7), dtype=jnp.float32)

    # Deterministic synthetic parameters (shapes from the module __init__).
    conv_w = 0.1 * jax.random.normal(k_w, (COUT, CIN, KH, KW), dtype=jnp.float32)
    conv_b = 0.1 * jax.random.normal(k_b, (COUT,), dtype=jnp.float32)
    bn_gamma = 1.0 + 0.1 * jax.random.normal(k_g, (COUT,), dtype=jnp.float32)
    bn_beta = 0.1 * jax.random.normal(k_be, (COUT,), dtype=jnp.float32)
    bn_mean = 0.1 * jax.random.normal(k_m, (COUT,), dtype=jnp.float32)
    bn_var = jnp.abs(jax.random.normal(k_v, (COUT,), dtype=jnp.float32)) + 0.5

    # Fold conv-bias + inference BN once (weight-load time), then run the kernel.
    w_pad, scale, bias = prepare_params(conv_w, conv_b, bn_gamma, bn_beta, bn_mean, bn_var)
    fwd = jax.jit(conv_block_forward)
    out = jax.block_until_ready(fwd(s, w_pad, scale, bias))

    ref = _reference(s, conv_w, conv_b, bn_gamma, bn_beta, bn_mean, bn_var)
    assert out.shape == (N, COUT, H, W), out.shape
    err = float(jnp.max(jnp.abs(out.astype(jnp.float32) - ref)))
    assert err < 5e-2, err   # bf16 matmul operands + bf16 output vs f32 reference
    print("KERNEL_OK")
</pallas_src>

<mosaic_0001>
module attributes {stable_mosaic.version = 11 : i64} {
  func.func @conv_bn_relu_kernel(%arg0: i32, %arg1: memref<128x32xbf16, #tpu.memory_space<vmem>>, %arg2: memref<32x128xbf16, #tpu.memory_space<vmem>>, %arg3: memref<128x1xf32, #tpu.memory_space<vmem>>, %arg4: memref<128x1xf32, #tpu.memory_space<vmem>>, %arg5: memref<128x128xbf16, #tpu.memory_space<vmem>>) attributes {dimension_semantics = [#tpu.dimension_semantics<parallel>], iteration_bounds = array<i64: 1>, scalar_prefetch = 0 : i64, scratch_operands = 0 : i64, tpu.core_type = #tpu.core_type<tc>, window_params = [{pipeline_mode = #tpu.pipeline_mode<synchronous>, transform_indices = @transform_0, window_bounds = array<i64: 128, 32>}, {transform_indices = @transform_1, window_bounds = array<i64: 32, 128>}, {pipeline_mode = #tpu.pipeline_mode<synchronous>, transform_indices = @transform_2, window_bounds = array<i64: 128, 1>}, {pipeline_mode = #tpu.pipeline_mode<synchronous>, transform_indices = @transform_3, window_bounds = array<i64: 128, 1>}, {transform_indices = @transform_4, window_bounds = array<i64: 128, 128>}]} {
    %c0 = arith.constant 0 : index
    %c0_0 = arith.constant 0 : index
    %0 = vector.load %arg1[%c0, %c0_0] : memref<128x32xbf16, #tpu.memory_space<vmem>>, vector<128x32xbf16>
    %c0_1 = arith.constant 0 : index
    %c0_2 = arith.constant 0 : index
    %1 = vector.load %arg2[%c0_1, %c0_2] : memref<32x128xbf16, #tpu.memory_space<vmem>>, vector<32x128xbf16>
    %cst = arith.constant dense<0.000000e+00> : vector<128x128xf32>
    %2 = tpu.matmul %0, %1, %cst {dimension_numbers = #tpu.dot_dimension_numbers<[1], [0], [0], [1], [0, 0, 1, 1], [], []>} : vector<128x32xbf16>, vector<32x128xbf16>, vector<128x128xf32> -> vector<128x128xf32>
    %c0_3 = arith.constant 0 : index
    %c0_4 = arith.constant 0 : index
    %3 = vector.load %arg3[%c0_3, %c0_4] : memref<128x1xf32, #tpu.memory_space<vmem>>, vector<128x1xf32>
    %4 = vector.broadcast %3 : vector<128x1xf32> to vector<128x128xf32>
    %5 = arith.mulf %2, %4 : vector<128x128xf32>
    %c0_5 = arith.constant 0 : index
    %c0_6 = arith.constant 0 : index
    %6 = vector.load %arg4[%c0_5, %c0_6] : memref<128x1xf32, #tpu.memory_space<vmem>>, vector<128x1xf32>
    %7 = vector.broadcast %6 : vector<128x1xf32> to vector<128x128xf32>
    %8 = arith.addf %5, %7 : vector<128x128xf32>
    %cst_7 = arith.constant 0.000000e+00 : f32
    %9 = vector.broadcast %cst_7 : f32 to vector<128x128xf32>
    %10 = arith.maximumf %8, %9 : vector<128x128xf32>
    %11 = arith.truncf %10 : vector<128x128xf32> to vector<128x128xbf16>
    %c0_8 = arith.constant 0 : index
    %c0_9 = arith.constant 0 : index
    %12 = vector.load %arg5[%c0_8, %c0_9] : memref<128x128xbf16, #tpu.memory_space<vmem>>, vector<128x128xbf16>
    tpu.vector_store %arg5[%c0_8, %c0_9], %11 {strides = array<i32>} : memref<128x128xbf16, #tpu.memory_space<vmem>>, vector<128x128xbf16>,
    return
  }
  func.func @transform_0(%arg0: i32) -> (i32, i32) {
    %c0_i32 = arith.constant 0 : i32
    %c0_i32_0 = arith.constant 0 : i32
    %c0_i32_1 = arith.constant 0 : i32
    return %c0_i32, %c0_i32_0 : i32, i32
  }
  func.func @transform_1(%arg0: i32) -> (i32, i32) {
    %c0_i32 = arith.constant 0 : i32
    %c0_i32_0 = arith.constant 0 : i32
    return %c0_i32, %arg0 : i32, i32
  }
  func.func @transform_2(%arg0: i32) -> (i32, i32) {
    %c0_i32 = arith.constant 0 : i32
    %c0_i32_0 = arith.constant 0 : i32
    %c0_i32_1 = arith.constant 0 : i32
    return %c0_i32, %c0_i32_0 : i32, i32
  }
  func.func @transform_3(%arg0: i32) -> (i32, i32) {
    %c0_i32 = arith.constant 0 : i32
    %c0_i32_0 = arith.constant 0 : i32
    %c0_i32_1 = arith.constant 0 : i32
    return %c0_i32, %c0_i32_0 : i32, i32
  }
  func.func @transform_4(%arg0: i32) -> (i32, i32) {
    %c0_i32 = arith.constant 0 : i32
    %c0_i32_0 = arith.constant 0 : i32
    return %c0_i32, %arg0 : i32, i32
  }
}

</mosaic_0001>

<llo_original>
// kernel: conv_block_forward.1
$region0: #{conv_block_forward.1}
  #allocation0 [shape = 'u32[]', space=smem, size = 0x4, offset = 0x4, fixed_abs, tag = 'smem constant byte address 0x4 - core index']
  #allocation1 [shape = 'u32[144,128]{1,0:T(1,128)}', space=vmem, size = 0x12000, scoped, tag = 'internal scratch']
  %s0 = inlined_call_operand.vmem [shape: bf16[128,32], index: 0, kind: input, shape index: {}]
  %s1 = inlined_call_operand.vmem [shape: bf16[32,128], index: 1, kind: input, shape index: {}]
  %s2 = inlined_call_operand.vmem [shape: f32[128,1], index: 2, kind: input, shape index: {}]
  %s3 = inlined_call_operand.vmem [shape: f32[128,1], index: 3, kind: input, shape index: {}]
  %s4 = inlined_call_operand.vmem [shape: bf16[128,128], index: 4, kind: output, shape index: {}]
  %s5 = sld [smem:[#allocation0]]
  $region26: #{conv_block_forward.1} parent=0
    _
  %s7 = ssub.s32 1, %s5
  %s8 = scalar_select 0, %s7, %s5
  // Predicated region
  $region2: #{conv_block_forward.1} parent=0 // pred_check
    _
  $region3: #{conv_block_forward.1} parent=0 // pred_check_branch
    %10 = sbr.rel (0) target = $region5
  $region4: #{conv_block_forward.1} parent=0 // pred_region
    _
  $region5: #{conv_block_forward.1} parent=0 // pred_fallthru
    _
  // Predicated region
  $region6: #{conv_block_forward.1} parent=0 // pred_check
    _
  $region7: #{conv_block_forward.1} parent=0 // pred_check_branch
    %12 = sbr.rel (0) target = $region9
  $region8: #{conv_block_forward.1} parent=0 // pred_region
    _
  $region9: #{conv_block_forward.1} parent=0 // pred_fallthru
    _
  // Predicated region
  $region10: #{conv_block_forward.1} parent=0 // pred_check
    _
  $region11: #{conv_block_forward.1} parent=0 // pred_check_branch
    %14 = sbr.rel (0) target = $region13
  $region12: #{conv_block_forward.1} parent=0 // pred_region
    _
  $region13: #{conv_block_forward.1} parent=0 // pred_fallthru
    _
  // Predicated region
  $region14: #{conv_block_forward.1} parent=0 // pred_check
    _
  $region15: #{conv_block_forward.1} parent=0 // pred_check_branch
    %16 = sbr.rel (0) target = $region17
  $region16: #{conv_block_forward.1} parent=0 // pred_region
    _
  $region17: #{conv_block_forward.1} parent=0 // pred_fallthru
    _
  %v18 = vld [vmem:[%s0] sm:$0xf]
  %v19 = vld [vmem:[%s0 + $0x4] sm:$0xf]
  %v20 = vld [vmem:[%s0 + $0x8] sm:$0xf]
  %v21 = vld [vmem:[%s0 + $0xc] sm:$0xf]
  %v22 = vld [vmem:[%s0 + $0x10] sm:$0xf]
  %v23 = vld [vmem:[%s0 + $0x14] sm:$0xf]
  %v24 = vld [vmem:[%s0 + $0x18] sm:$0xf]
  %v25 = vld [vmem:[%s0 + $0x1c] sm:$0xf]
  %v26 = vld [vmem:[%s0 + $0x20] sm:$0xf]
  %v27 = vld [vmem:[%s0 + $0x24] sm:$0xf]
  %v28 = vld [vmem:[%s0 + $0x28] sm:$0xf]
  %v29 = vld [vmem:[%s0 + $0x2c] sm:$0xf]
  %v30 = vld [vmem:[%s0 + $0x30] sm:$0xf]
  %v31 = vld [vmem:[%s0 + $0x34] sm:$0xf]
  %v32 = vld [vmem:[%s0 + $0x38] sm:$0xf]
  %v33 = vld [vmem:[%s0 + $0x3c] sm:$0xf]
  %v34 = vld [vmem:[%s1] sm:$0xf]
  %v35 = vld [vmem:[%s1 + $0x4] sm:$0xf]
  %v36 = vld [vmem:[%s1 + $0x8] sm:$0xf]
  %v37 = vld [vmem:[%s1 + $0xc] sm:$0xf]
  %v54 = vunpack.c.l.b16 %v18
  %v55 = vunpack.c.l.b16 %v19
  %v56 = vunpack.c.l.b16 %v20
  %v57 = vunpack.c.l.b16 %v21
  %v58 = vunpack.c.l.b16 %v22
  %v59 = vunpack.c.l.b16 %v23
  %v60 = vunpack.c.l.b16 %v24
  %v61 = vunpack.c.l.b16 %v25
  %v62 = vunpack.c.l.b16 %v26
  %v63 = vunpack.c.l.b16 %v27
  %v64 = vunpack.c.l.b16 %v28
  %v65 = vunpack.c.l.b16 %v29
  %v66 = vunpack.c.l.b16 %v30
  %v67 = vunpack.c.l.b16 %v31
  %v68 = vunpack.c.l.b16 %v32
  %v69 = vunpack.c.l.b16 %v33
  %v70 = vpack.c.b16 %v55, %v54
  %v71 = vpack.c.b16 %v57, %v56
  %v72 = vpack.c.b16 %v59, %v58
  %v73 = vpack.c.b16 %v61, %v60
  %v74 = vpack.c.b16 %v63, %v62
  %v75 = vpack.c.b16 %v65, %v64
  %v76 = vpack.c.b16 %v67, %v66
  %v77 = vpack.c.b16 %v69, %v68
  %v82 = vunpack.c.l.b16 %v34
  %v83 = vunpack.c.l.b16 %v35
  %v84 = vunpack.c.l.b16 %v36
  %v85 = vunpack.c.l.b16 %v37
  %v86 = vpack.c.b16 %v83, %v82
  %v87 = vpack.c.b16 %v85, %v84
  %vm90 = vcmask 261120
  %v92 = vsel %vm90, %v70, 0
  %v95 = vsel %vm90, %v71, 0
  %v98 = vsel %vm90, %v72, 0
  %v101 = vsel %vm90, %v73, 0
  %v104 = vsel %vm90, %v74, 0
  %v107 = vsel %vm90, %v75, 0
  %v110 = vsel %vm90, %v76, 0
  %v113 = vsel %vm90, %v77, 0
  %115 = vmatprep.subr.bf16.mxu0 0
  %116 = vmatpush1.bf16.msra.mxu0 %v86
  %117 = vmatprep.subr.bf16.mxu0 0
  %118 = vmatpush1.bf16.msra.mxu0 %v87
  %119 = vmatprep.subr.bf16.mxu0 0
  %120 = vmatpush1.bf16.msra.mxu0 0
  %121 = vmatprep.subr.bf16.mxu0 0
  %122 = vmatpush1.bf16.msra.mxu0 0
  %123 = vmatprep.subr.bf16.mxu0 0
  %124 = vmatpush1.bf16.msra.mxu0 0
  %125 = vmatprep.subr.bf16.mxu0 0
  %126 = vmatpush1.bf16.msra.mxu0 0
  %127 = vmatprep.subr.bf16.mxu0 0
  %128 = vmatpush1.bf16.msra.mxu0 0
  %129 = vmatprep.subr.bf16.mxu0 0
  %130 = vmatpush1.bf16.msra.mxu0 0
  %131 = vmatprep.subr.bf16.mxu0 0
  %132 = vmatpush1.bf16.msra.mxu0 0
  %133 = vmatprep.subr.bf16.mxu0 0
  %134 = vmatpush1.bf16.msra.mxu0 0
  %135 = vmatprep.subr.bf16.mxu0 0
  %136 = vmatpush1.bf16.msra.mxu0 0
  %137 = vmatprep.subr.bf16.mxu0 0
  %138 = vmatpush1.bf16.msra.mxu0 0
  %139 = vmatprep.subr.bf16.mxu0 0
  %140 = vmatpush1.bf16.msra.mxu0 0
  %141 = vmatprep.subr.bf16.mxu0 0
  %142 = vmatpush1.bf16.msra.mxu0 0
  %143 = vmatprep.subr.bf16.mxu0 0
  %144 = vmatpush1.bf16.msra.mxu0 0
  %145 = vmatprep.subr.bf16.mxu0 0
  %146 = vmatpush1.bf16.msra.mxu0 0
  %147 = vmatprep.mubr.bf16.mxu0 0
  %148 = vmatmul.mubr.bf16.gmra.mrb[0].mxu0 %v92
  %v149 = vpop.f32.mrb[0].mxu0
  %v150 = vadd.f32 0.0, %v149
  %v151 = vpop.f32.mrb[0].mxu0
  %v152 = vpop.f32.mrb[0].mxu0
  %v153 = vadd.f32 0.0, %v152
  %v154 = vpop.f32.mrb[0].mxu0
  %155 = vmatprep.mubr.bf16.mxu0 0
  %156 = vmatmul.mubr.bf16.gmra.mrb[0].mxu0 %v95
  %v157 = vpop.f32.mrb[0].mxu0
  %v158 = vadd.f32 0.0, %v157
  %v159 = vpop.f32.mrb[0].mxu0
  %v160 = vpop.f32.mrb[0].mxu0
  %v161 = vadd.f32 0.0, %v160
  %v162 = vpop.f32.mrb[0].mxu0
  %163 = vmatprep.mubr.bf16.mxu0 0
  %164 = vmatmul.mubr.bf16.gmra.mrb[0].mxu0 %v98
  %v165 = vpop.f32.mrb[0].mxu0
  %v166 = vadd.f32 0.0, %v165
  %v167 = vpop.f32.mrb[0].mxu0
  %v168 = vpop.f32.mrb[0].mxu0
  %v169 = vadd.f32 0.0, %v168
  %v170 = vpop.f32.mrb[0].mxu0
  %171 = vmatprep.mubr.bf16.mxu0 0
  %172 = vmatmul.mubr.bf16.gmra.mrb[0].mxu0 %v101
  %v173 = vpop.f32.mrb[0].mxu0
  %v174 = vadd.f32 0.0, %v173
  %v175 = vpop.f32.mrb[0].mxu0
  %v176 = vpop.f32.mrb[0].mxu0
  %v177 = vadd.f32 0.0, %v176
  %v178 = vpop.f32.mrb[0].mxu0
  %179 = vmatprep.mubr.bf16.mxu0 0
  %180 = vmatmul.mubr.bf16.gmra.mrb[0].mxu0 %v104
  %v181 = vpop.f32.mrb[0].mxu0
  %v182 = vadd.f32 0.0, %v181
  %v183 = vpop.f32.mrb[0].mxu0
  %v184 = vpop.f32.mrb[0].mxu0
  %v185 = vadd.f32 0.0, %v184
  %v186 = vpop.f32.mrb[0].mxu0
  %187 = vmatprep.mubr.bf16.mxu0 0
  %188 = vmatmul.mubr.bf16.gmra.mrb[0].mxu0 %v107
  %v189 = vpop.f32.mrb[0].mxu0
  %v190 = vadd.f32 0.0, %v189
  %v191 = vpop.f32.mrb[0].mxu0
  %v192 = vpop.f32.mrb[0].mxu0
  %v193 = vadd.f32 0.0, %v192
  %v194 = vpop.f32.mrb[0].mxu0
  %195 = vmatprep.mubr.bf16.mxu0 0
  %196 = vmatmul.mubr.bf16.gmra.mrb[0].mxu0 %v110
  %v197 = vpop.f32.mrb[0].mxu0
  %v198 = vadd.f32 0.0, %v197
  %v199 = vpop.f32.mrb[0].mxu0
  %v200 = vpop.f32.mrb[0].mxu0
  %v201 = vadd.f32 0.0, %v200
  %v202 = vpop.f32.mrb[0].mxu0
  %203 = vmatprep.mubr.bf16.mxu0 0
  %204 = vmatmul.mubr.bf16.gmra.mrb[0].mxu0 %v113
  %v205 = vpop.f32.mrb[0].mxu0
  %v206 = vadd.f32 0.0, %v205
  %v207 = vpop.f32.mrb[0].mxu0
  %v208 = vpop.f32.mrb[0].mxu0
  %v209 = vadd.f32 0.0, %v208
  %v210 = vpop.f32.mrb[0].mxu0
  %211 = vdwg.mxu0
  %v212 = vld [vmem:[%s2] sm:$0xff]
  %v213 = vld [vmem:[%s2 + $0x8] sm:$0xff]
  %v214 = vld [vmem:[%s2 + $0x10] sm:$0xff]
  %v215 = vld [vmem:[%s2 + $0x18] sm:$0xff]
  %v216 = vld [vmem:[%s2 + $0x20] sm:$0xff]
  %v217 = vld [vmem:[%s2 + $0x28] sm:$0xff]
  %v218 = vld [vmem:[%s2 + $0x30] sm:$0xff]
  %v219 = vld [vmem:[%s2 + $0x38] sm:$0xff]
  %v220 = vld [vmem:[%s2 + $0x40] sm:$0xff]
  %v221 = vld [vmem:[%s2 + $0x48] sm:$0xff]
  %v222 = vld [vmem:[%s2 + $0x50] sm:$0xff]
  %v223 = vld [vmem:[%s2 + $0x58] sm:$0xff]
  %v224 = vld [vmem:[%s2 + $0x60] sm:$0xff]
  %v225 = vld [vmem:[%s2 + $0x68] sm:$0xff]
  %v226 = vld [vmem:[%s2 + $0x70] sm:$0xff]
  %v227 = vld [vmem:[%s2 + $0x78] sm:$0xff]
  %229 = vset.pattern.permute.xlu0 0
  %230 = vperm.xlu0 %229, %v212
  %v231 = vpop.permute.xlu0 %230
  %234 = vset.pattern.permute.xlu0 0
  %235 = vperm.xlu0 %234, %v213
  %v236 = vpop.permute.xlu0 %235
  %239 = vset.pattern.permute.xlu0 0
  %240 = vperm.xlu0 %239, %v214
  %v241 = vpop.permute.xlu0 %240
  %244 = vset.pattern.permute.xlu0 0
  %245 = vperm.xlu0 %244, %v215
  %v246 = vpop.permute.xlu0 %245
  %249 = vset.pattern.permute.xlu0 0
  %250 = vperm.xlu0 %249, %v216
  %v251 = vpop.permute.xlu0 %250
  %254 = vset.pattern.permute.xlu0 0
  %255 = vperm.xlu0 %254, %v217
  %v256 = vpop.permute.xlu0 %255
  %259 = vset.pattern.permute.xlu0 0
  %260 = vperm.xlu0 %259, %v218
  %v261 = vpop.permute.xlu0 %260
  %264 = vset.pattern.permute.xlu0 0
  %265 = vperm.xlu0 %264, %v219
  %v266 = vpop.permute.xlu0 %265
  %269 = vset.pattern.permute.xlu0 0
  %270 = vperm.xlu0 %269, %v220
  %v271 = vpop.permute.xlu0 %270
  %274 = vset.pattern.permute.xlu0 0
  %275 = vperm.xlu0 %274, %v221
  %v276 = vpop.permute.xlu0 %275
  %279 = vset.pattern.permute.xlu0 0
  %280 = vperm.xlu0 %279, %v222
  %v281 = vpop.permute.xlu0 %280
  %284 = vset.pattern.permute.xlu0 0
  %285 = vperm.xlu0 %284, %v223
  %v286 = vpop.permute.xlu0 %285
  %289 = vset.pattern.permute.xlu0 0
  %290 = vperm.xlu0 %289, %v224
  %v291 = vpop.permute.xlu0 %290
  %294 = vset.pattern.permute.xlu0 0
  %295 = vperm.xlu0 %294, %v225
  %v296 = vpop.permute.xlu0 %295
  %299 = vset.pattern.permute.xlu0 0
  %300 = vperm.xlu0 %299, %v226
  %v301 = vpop.permute.xlu0 %300
  %304 = vset.pattern.permute.xlu0 0
  %305 = vperm.xlu0 %304, %v227
  %v306 = vpop.permute.xlu0 %305
  %v308 = vmul.f32 %v150, %v231
  %v309 = vmul.f32 %v153, %v236
  %v310 = vmul.f32 %v158, %v241
  %v311 = vmul.f32 %v161, %v246
  %v312 = vmul.f32 %v166, %v251
  %v313 = vmul.f32 %v169, %v256
  %v314 = vmul.f32 %v174, %v261
  %v315 = vmul.f32 %v177, %v266
  %v316 = vmul.f32 %v182, %v271
  %v317 = vmul.f32 %v185, %v276
  %v318 = vmul.f32 %v190, %v281
  %v319 = vmul.f32 %v193, %v286
  %v320 = vmul.f32 %v198, %v291
  %v321 = vmul.f32 %v201, %v296
  %v322 = vmul.f32 %v206, %v301
  %v323 = vmul.f32 %v209, %v306
  %v324 = vld [vmem:[%s3] sm:$0xff]
  %v325 = vld [vmem:[%s3 + $0x8] sm:$0xff]
  %v326 = vld [vmem:[%s3 + $0x10] sm:$0xff]
  %v327 = vld [vmem:[%s3 + $0x18] sm:$0xff]
  %v328 = vld [vmem:[%s3 + $0x20] sm:$0xff]
  %v329 = vld [vmem:[%s3 + $0x28] sm:$0xff]
  %v330 = vld [vmem:[%s3 + $0x30] sm:$0xff]
  %v331 = vld [vmem:[%s3 + $0x38] sm:$0xff]
  %v332 = vld [vmem:[%s3 + $0x40] sm:$0xff]
  %v333 = vld [vmem:[%s3 + $0x48] sm:$0xff]
  %v334 = vld [vmem:[%s3 + $0x50] sm:$0xff]
  %v335 = vld [vmem:[%s3 + $0x58] sm:$0xff]
  %v336 = vld [vmem:[%s3 + $0x60] sm:$0xff]
  %v337 = vld [vmem:[%s3 + $0x68] sm:$0xff]
  %v338 = vld [vmem:[%s3 + $0x70] sm:$0xff]
  %v339 = vld [vmem:[%s3 + $0x78] sm:$0xff]
  %341 = vset.pattern.permute.xlu0 0
  %342 = vperm.xlu0 %341, %v324
  %v343 = vpop.permute.xlu0 %342
  %346 = vset.pattern.permute.xlu0 0
  %347 = vperm.xlu0 %346, %v325
  %v348 = vpop.permute.xlu0 %347
  %351 = vset.pattern.permute.xlu0 0
  %352 = vperm.xlu0 %351, %v326
  %v353 = vpop.permute.xlu0 %352
  %356 = vset.pattern.permute.xlu0 0
  %357 = vperm.xlu0 %356, %v327
  %v358 = vpop.permute.xlu0 %357
  %361 = vset.pattern.permute.xlu0 0
  %362 = vperm.xlu0 %361, %v328
  %v363 = vpop.permute.xlu0 %362
  %366 = vset.pattern.permute.xlu0 0
  %367 = vperm.xlu0 %366, %v329
  %v368 = vpop.permute.xlu0 %367
  %371 = vset.pattern.permute.xlu0 0
  %372 = vperm.xlu0 %371, %v330
  %v373 = vpop.permute.xlu0 %372
  %376 = vset.pattern.permute.xlu0 0
  %377 = vperm.xlu0 %376, %v331
  %v378 = vpop.permute.xlu0 %377
  %381 = vset.pattern.permute.xlu0 0
  %382 = vperm.xlu0 %381, %v332
  %v383 = vpop.permute.xlu0 %382
  %386 = vset.pattern.permute.xlu0 0
  %387 = vperm.xlu0 %386, %v333
  %v388 = vpop.permute.xlu0 %387
  %391 = vset.pattern.permute.xlu0 0
  %392 = vperm.xlu0 %391, %v334
  %v393 = vpop.permute.xlu0 %392
  %396 = vset.pattern.permute.xlu0 0
  %397 = vperm.xlu0 %396, %v335
  %v398 = vpop.permute.xlu0 %397
  %401 = vset.pattern.permute.xlu0 0
  %402 = vperm.xlu0 %401, %v336
  %v403 = vpop.permute.xlu0 %402
  %406 = vset.pattern.permute.xlu0 0
  %407 = vperm.xlu0 %406, %v337
  %v408 = vpop.permute.xlu0 %407
  %411 = vset.pattern.permute.xlu0 0
  %412 = vperm.xlu0 %411, %v338
  %v413 = vpop.permute.xlu0 %412
  %416 = vset.pattern.permute.xlu0 0
  %417 = vperm.xlu0 %416, %v339
  %v418 = vpop.permute.xlu0 %417
  %v420 = vadd.f32 %v308, %v343
  %v421 = vadd.f32 %v309, %v348
  %v422 = vadd.f32 %v310, %v353
  %v423 = vadd.f32 %v311, %v358
  %v424 = vadd.f32 %v312, %v363
  %v425 = vadd.f32 %v313, %v368
  %v426 = vadd.f32 %v314, %v373
  %v427 = vadd.f32 %v315, %v378
  %v428 = vadd.f32 %v316, %v383
  %v429 = vadd.f32 %v317, %v388
  %v430 = vadd.f32 %v318, %v393
  %v431 = vadd.f32 %v319, %v398
  %v432 = vadd.f32 %v320, %v403
  %v433 = vadd.f32 %v321, %v408
  %v434 = vadd.f32 %v322, %v413
  %v435 = vadd.f32 %v323, %v418
  %v436 = vmax.f32 %v420, 0.0
  %v437 = vmax.f32 %v421, 0.0
  %v438 = vmax.f32 %v422, 0.0
  %v439 = vmax.f32 %v423, 0.0
  %v440 = vmax.f32 %v424, 0.0
  %v441 = vmax.f32 %v425, 0.0
  %v442 = vmax.f32 %v426, 0.0
  %v443 = vmax.f32 %v427, 0.0
  %v444 = vmax.f32 %v428, 0.0
  %v445 = vmax.f32 %v429, 0.0
  %v446 = vmax.f32 %v430, 0.0
  %v447 = vmax.f32 %v431, 0.0
  %v448 = vmax.f32 %v432, 0.0
  %v449 = vmax.f32 %v433, 0.0
  %v450 = vmax.f32 %v434, 0.0
  %v451 = vmax.f32 %v435, 0.0
  %v452 = vpack.c.bf16 %v437, %v436
  %v453 = vpack.c.bf16 %v439, %v438
  %v454 = vpack.c.bf16 %v441, %v440
  %v455 = vpack.c.bf16 %v443, %v442
  %v456 = vpack.c.bf16 %v445, %v444
  %v457 = vpack.c.bf16 %v447, %v446
  %v458 = vpack.c.bf16 %v449, %v448
  %v459 = vpack.c.bf16 %v451, %v450
  %v468 = vunpack.c.l.b16 %v452
  %v469 = vunpack.c.h.b16 %v452
  %v470 = vunpack.c.l.b16 %v453
  %v471 = vunpack.c.h.b16 %v453
  %v472 = vunpack.c.l.b16 %v454
  %v473 = vunpack.c.h.b16 %v454
  %v474 = vunpack.c.l.b16 %v455
  %v475 = vunpack.c.h.b16 %v455
  %v476 = vunpack.c.l.b16 %v456
  %v477 = vunpack.c.h.b16 %v456
  %v478 = vunpack.c.l.b16 %v457
  %v479 = vunpack.c.h.b16 %v457
  %v480 = vunpack.c.l.b16 %v458
  %v481 = vunpack.c.h.b16 %v458
  %v482 = vunpack.c.l.b16 %v459
  %v483 = vunpack.c.h.b16 %v459
  %v484 = vpack.c.b16 %v468, %v468
  %v485 = vpack.c.b16 %v469, %v469
  %v486 = vpack.c.b16 %v470, %v470
  %v487 = vpack.c.b16 %v471, %v471
  %v488 = vpack.c.b16 %v472, %v472
  %v489 = vpack.c.b16 %v473, %v473
  %v490 = vpack.c.b16 %v474, %v474
  %v491 = vpack.c.b16 %v475, %v475
  %v492 = vpack.c.b16 %v476, %v476
  %v493 = vpack.c.b16 %v477, %v477
  %v494 = vpack.c.b16 %v478, %v478
  %v495 = vpack.c.b16 %v479, %v479
  %v496 = vpack.c.b16 %v480, %v480
  %v497 = vpack.c.b16 %v481, %v481
  %v498 = vpack.c.b16 %v482, %v482
  %v499 = vpack.c.b16 %v483, %v483
  %516 = vst [vmem:[%s4] sm:$0xf] %v484
  %517 = vst [vmem:[%s4 + $0x4] sm:$0xf] %v485
  %518 = vst [vmem:[%s4 + $0x8] sm:$0xf] %v486
  %519 = vst [vmem:[%s4 + $0xc] sm:$0xf] %v487
  %520 = vst [vmem:[%s4 + $0x10] sm:$0xf] %v488
  %521 = vst [vmem:[%s4 + $0x14] sm:$0xf] %v489
  %522 = vst [vmem:[%s4 + $0x18] sm:$0xf] %v490
  %523 = vst [vmem:[%s4 + $0x1c] sm:$0xf] %v491
  %524 = vst [vmem:[%s4 + $0x20] sm:$0xf] %v492
  %525 = vst [vmem:[%s4 + $0x24] sm:$0xf] %v493
  %526 = vst [vmem:[%s4 + $0x28] sm:$0xf] %v494
  %527 = vst [vmem:[%s4 + $0x2c] sm:$0xf] %v495
  %528 = vst [vmem:[%s4 + $0x30] sm:$0xf] %v496
  %529 = vst [vmem:[%s4 + $0x34] sm:$0xf] %v497
  %530 = vst [vmem:[%s4 + $0x38] sm:$0xf] %v498
  %531 = vst [vmem:[%s4 + $0x3c] sm:$0xf] %v499
  // Predicated region
  $region18: #{conv_block_forward.1} parent=0 // pred_check
    _
  $region19: #{conv_block_forward.1} parent=0 // pred_check_branch
    %533 = sbr.rel (0) target = $region21
  $region20: #{conv_block_forward.1} parent=0 // pred_region
    _
  $region21: #{conv_block_forward.1} parent=0 // pred_fallthru
    _
  // Predicated region
  $region22: #{conv_block_forward.1} parent=0 // pred_check
    _
  $region23: #{conv_block_forward.1} parent=0 // pred_check_branch
    %535 = sbr.rel (0) target = $region25
  $region24: #{conv_block_forward.1} parent=0 // pred_region
    _
  $region25: #{conv_block_forward.1} parent=0 // pred_fallthru
    _

</llo_original>
